<compile_context>
chip_gen: v7x
topology: tpu7x:2x2x1
jax: 0.10.0
libtpu: 0.0.40
codegen_flags: <defaults>
</compile_context>

<pallas_src>
import functools

import jax
import jax.numpy as jnp
from jax.experimental import pallas as pl
from jax.experimental.pallas import tpu as pltpu


def _round_up(x, m):
    return ((x + m - 1) // m) * m


def _llama_mlp_kernel(x_ref, wg_ref, wu_ref, wd_ref, o_ref, acc_ref, *, n_i):
    # x_ref  : (tm, E)      token tile (resident across the j axis)
    # wg_ref : (E, tn)      gate_proj weight tile (pre-transposed)
    # wu_ref : (E, tn)      up_proj weight tile (pre-transposed)
    # wd_ref : (tn, E)      down_proj weight tile (pre-transposed)
    # o_ref  : (tm, E)      output tile (written only on the last j step)
    # acc_ref: (tm, E) f32  down-projection accumulator (VMEM scratch)
    x = x_ref[...]

    # Two MXU matmuls, f32 accumulation regardless of storage dtype.
    gate = jnp.dot(x, wg_ref[...], preferred_element_type=jnp.float32)
    up = jnp.dot(x, wu_ref[...], preferred_element_type=jnp.float32)
    hidden = gate * jax.nn.sigmoid(gate) * up  # SiLU(gate) * up, in f32

    # Partial down-projection for this I-tile.
    partial = jnp.dot(hidden.astype(wd_ref.dtype), wd_ref[...],
                      preferred_element_type=jnp.float32)

    if n_i == 1:
        # Single reduction step: no accumulator round-trip at all.
        o_ref[...] = partial.astype(o_ref.dtype)
    else:
        j = pl.program_id(1)

        @pl.when(j == 0)
        def _init():
            acc_ref[...] = partial

        @pl.when(jnp.logical_and(j > 0, j < n_i - 1))
        def _accumulate():
            acc_ref[...] += partial

        @pl.when(j == n_i - 1)
        def _finalize():
            # Fuse the last partial into the output store: saves one full
            # (tm, E) f32 store + reload of the accumulator per M-tile.
            o_ref[...] = (acc_ref[...] + partial).astype(o_ref.dtype)


def _tpu_physical_vmem_bytes():
    try:
        return int(pltpu.get_tpu_info().vmem_capacity_bytes)
    except Exception:
        pass
    try:
        kind = jax.devices()[0].device_kind.lower()
        if "v7" in kind:
            return 64 * 1024 * 1024
        return 128 * 1024 * 1024  # v5e / v6e
    except Exception:
        return 64 * 1024 * 1024


def _default_tm():
    try:
        kind = jax.devices()[0].device_kind.lower()
    except Exception:
        kind = ""
    if "v6" in kind:
        return 1024  # 128 MiB VMEM; needs big tm to be MXU-bound
    if "v7" in kind:
        return 512   # 64 MiB VMEM per TensorCore
    return 512       # v5e (balance point ~240) and fallback


def _vmem_need_bytes(tm, tn, E, itemsize):
    # Double-buffered weight tiles (wg (E,tn), wu (E,tn), wd (tn,E)).
    w = 2 * (3 * E * tn) * itemsize
    # x / out tiles (resident across j but allocated double-buffered).
    xo = 2 * (2 * tm * E) * itemsize
    # f32 accumulator scratch.
    acc = tm * E * 4
    # In-kernel f32 temporaries: gate / up / hidden (tm,tn) + partial (tm,E).
    tmp = 3 * tm * tn * 4 + tm * E * 4
    return w + xo + acc + tmp


def llama_mlp_prepacked(x, wg_t, wu_t, wd_t, *, tm=None, tn=512):
    """Hot path.  x: (B, S, E).  Weights pre-transposed:
    wg_t, wu_t: (E, I);  wd_t: (I, E)."""
    B, S, E = x.shape
    I = wg_t.shape[1]
    assert wg_t.shape == (E, I) and wu_t.shape == (E, I) and wd_t.shape == (I, E)

    dtype = x.dtype
    itemsize = jnp.dtype(dtype).itemsize
    sublane = {4: 8, 2: 16, 1: 32}.get(itemsize, 8)

    if tm is None:
        tm = _default_tm()

    M = B * S

    # --- intermediate-dim tiling: 128-aligned; pad I with zeros if needed ---
    tn_eff = min(tn, _round_up(I, 128))
    tn_eff = max(128, (tn_eff // 128) * 128)

    # --- shrink tiles if they would not fit the chip's VMEM budget ----------
    phys_vmem = _tpu_physical_vmem_bytes()
    budget = int(phys_vmem * 0.85)
    tm_target = max(sublane, min(tm, _round_up(M, sublane)))
    while (_vmem_need_bytes(tm_target, tn_eff, E, itemsize) > budget
           and tn_eff > 256):
        tn_eff = max(256, ((tn_eff // 2) // 128) * 128)
    while (_vmem_need_bytes(tm_target, tn_eff, E, itemsize) > budget
           and tm_target > sublane):
        tm_target = max(sublane, _round_up(tm_target // 2, sublane))

    # --- token tiling: balanced tiles that minimize M padding ---------------
    num_m = pl.cdiv(M, tm_target)
    tm_eff = _round_up(pl.cdiv(M, num_m), sublane)
    M_pad = num_m * tm_eff

    I_pad = _round_up(I, tn_eff)
    n_i = I_pad // tn_eff

    # --- pad activations / weights (zero padding is exact through SiLU) -----
    x2d = x.reshape(M, E)
    if M_pad != M:
        x2d = jnp.pad(x2d, ((0, M_pad - M), (0, 0)))
    if I_pad != I:
        wg_t = jnp.pad(wg_t, ((0, 0), (0, I_pad - I)))
        wu_t = jnp.pad(wu_t, ((0, 0), (0, I_pad - I)))
        wd_t = jnp.pad(wd_t, ((0, I_pad - I), (0, 0)))

    # --- advisory cost estimate: weights are re-streamed once per M-tile ----
    flops = 2 * M_pad * E * (2 * I_pad) + 2 * M_pad * I_pad * E
    weight_bytes = 3 * E * I_pad * itemsize * num_m
    bytes_accessed = int(weight_bytes + 2 * M_pad * E * itemsize)
    cost = pl.CostEstimate(flops=flops,
                           transcendentals=M_pad * I_pad,
                           bytes_accessed=bytes_accessed)

    # --- VMEM limit: accurate need (incl. f32 temporaries) + margin ---------
    need = _vmem_need_bytes(tm_eff, tn_eff, E, itemsize)
    vmem_limit = int(min(max(int(need * 1.25) + (4 << 20), 32 * 1024 * 1024),
                         budget))

    kernel = functools.partial(_llama_mlp_kernel, n_i=n_i)

    out2d = pl.pallas_call(
        kernel,
        out_shape=jax.ShapeDtypeStruct((M_pad, E), dtype),
        grid_spec=pltpu.PrefetchScalarGridSpec(
            num_scalar_prefetch=0,
            grid=(num_m, n_i),
            in_specs=[
                pl.BlockSpec((tm_eff, E), lambda i, j: (i, 0)),      # x
                pl.BlockSpec((E, tn_eff), lambda i, j: (0, j)),      # gate W^T
                pl.BlockSpec((E, tn_eff), lambda i, j: (0, j)),      # up   W^T
                pl.BlockSpec((tn_eff, E), lambda i, j: (j, 0)),      # down W^T
            ],
            out_specs=pl.BlockSpec((tm_eff, E), lambda i, j: (i, 0)),
            scratch_shapes=[pltpu.VMEM((tm_eff, E), jnp.float32)],
        ),
        compiler_params=pltpu.CompilerParams(
            dimension_semantics=("parallel", "arbitrary"),
            vmem_limit_bytes=vmem_limit,
        ),
        cost_estimate=cost,
    )(x2d, wg_t, wu_t, wd_t)

    return out2d[:M].reshape(B, S, E)


def llama_mlp(x, w_gate, w_up, w_down, *, tm=None, tn=512):
    """Convenience wrapper taking PyTorch nn.Linear layouts (out_dim, in_dim).

    In a real model the transposes below happen once at weight-load time; the
    per-call hot path is llama_mlp_prepacked().
    """
    B, S, E = x.shape
    I = w_gate.shape[0]
    assert w_gate.shape == (I, E) and w_up.shape == (I, E) and w_down.shape == (E, I)
    return llama_mlp_prepacked(x, w_gate.T, w_up.T, w_down.T, tm=tm, tn=tn)


if __name__ == "__main__":
    # Small config consistent with the module: embed_dim=128, intermediate_dim=256.
    B, S, E, I = 2, 8, 128, 256
    dtype = jnp.float32

    key = jax.random.PRNGKey(0)
    kx, kg, ku, kd = jax.random.split(key, 4)

    x = jax.random.normal(kx, (B, S, E), dtype=dtype)
    # nn.Linear(in, out, bias=False) -> weight shape (out, in)
    w_gate = jax.random.normal(kg, (I, E), dtype=dtype) * 0.02
    w_up = jax.random.normal(ku, (I, E), dtype=dtype) * 0.02
    w_down = jax.random.normal(kd, (E, I), dtype=dtype) * 0.02

    out = llama_mlp(x, w_gate, w_up, w_down)
    out = jax.block_until_ready(out)

    # Reference check (plain JAX).
    g = x @ w_gate.T
    u = x @ w_up.T
    ref = (g * jax.nn.sigmoid(g) * u) @ w_down.T
    assert out.shape == (B, S, E)
    assert jnp.allclose(out, ref, atol=2e-4, rtol=2e-4)

    print("KERNEL_OK")
</pallas_src>

<mosaic_0001>
module attributes {stable_mosaic.version = 11 : i64} {
  func.func @_llama_mlp_kernel(%arg0: i32, %arg1: i32, %arg2: memref<16x128xf32, #tpu.memory_space<vmem>>, %arg3: memref<128x256xf32, #tpu.memory_space<vmem>>, %arg4: memref<128x256xf32, #tpu.memory_space<vmem>>, %arg5: memref<256x128xf32, #tpu.memory_space<vmem>>, %arg6: memref<16x128xf32, #tpu.memory_space<vmem>>, %arg7: memref<16x128xf32, #tpu.memory_space<vmem>>) attributes {dimension_semantics = [#tpu.dimension_semantics<parallel>, #tpu.dimension_semantics<arbitrary>], iteration_bounds = array<i64: 1, 1>, scalar_prefetch = 0 : i64, scratch_operands = 1 : i64, tpu.core_type = #tpu.core_type<tc>, window_params = [{transform_indices = @transform_0, window_bounds = array<i64: 16, 128>}, {transform_indices = @transform_1, window_bounds = array<i64: 128, 256>}, {transform_indices = @transform_2, window_bounds = array<i64: 128, 256>}, {transform_indices = @transform_3, window_bounds = array<i64: 256, 128>}, {transform_indices = @transform_4, window_bounds = array<i64: 16, 128>}]} {
    %c0 = arith.constant 0 : index
    %c0_0 = arith.constant 0 : index
    %0 = vector.load %arg2[%c0, %c0_0] : memref<16x128xf32, #tpu.memory_space<vmem>>, vector<16x128xf32>
    %c0_1 = arith.constant 0 : index
    %c0_2 = arith.constant 0 : index
    %1 = vector.load %arg3[%c0_1, %c0_2] : memref<128x256xf32, #tpu.memory_space<vmem>>, vector<128x256xf32>
    %cst = arith.constant dense<0.000000e+00> : vector<16x256xf32>
    %2 = tpu.matmul %0, %1, %cst {dimension_numbers = #tpu.dot_dimension_numbers<[1], [0], [0], [1], [0, 0, 1, 1], [], []>} : vector<16x128xf32>, vector<128x256xf32>, vector<16x256xf32> -> vector<16x256xf32>
    %c0_3 = arith.constant 0 : index
    %c0_4 = arith.constant 0 : index
    %3 = vector.load %arg4[%c0_3, %c0_4] : memref<128x256xf32, #tpu.memory_space<vmem>>, vector<128x256xf32>
    %cst_5 = arith.constant dense<0.000000e+00> : vector<16x256xf32>
    %4 = tpu.matmul %0, %3, %cst_5 {dimension_numbers = #tpu.dot_dimension_numbers<[1], [0], [0], [1], [0, 0, 1, 1], [], []>} : vector<16x128xf32>, vector<128x256xf32>, vector<16x256xf32> -> vector<16x256xf32>
    %5 = arith.negf %2 : vector<16x256xf32>
    %6 = math.exp %5 : vector<16x256xf32>
    %cst_6 = arith.constant 1.000000e+00 : f32
    %7 = vector.broadcast %cst_6 : f32 to vector<16x256xf32>
    %8 = arith.addf %7, %6 : vector<16x256xf32>
    %9 = arith.divf %7, %8 : vector<16x256xf32>
    %10 = arith.mulf %2, %9 : vector<16x256xf32>
    %11 = arith.mulf %10, %4 : vector<16x256xf32>
    %c0_7 = arith.constant 0 : index
    %c0_8 = arith.constant 0 : index
    %12 = vector.load %arg5[%c0_7, %c0_8] : memref<256x128xf32, #tpu.memory_space<vmem>>, vector<256x128xf32>
    %cst_9 = arith.constant dense<0.000000e+00> : vector<16x128xf32>
    %13 = tpu.matmul %11, %12, %cst_9 {dimension_numbers = #tpu.dot_dimension_numbers<[1], [0], [0], [1], [0, 0, 1, 1], [], []>} : vector<16x256xf32>, vector<256x128xf32>, vector<16x128xf32> -> vector<16x128xf32>
    %c0_10 = arith.constant 0 : index
    %c0_11 = arith.constant 0 : index
    %14 = vector.load %arg6[%c0_10, %c0_11] : memref<16x128xf32, #tpu.memory_space<vmem>>, vector<16x128xf32>
    tpu.vector_store %arg6[%c0_10, %c0_11], %13 {strides = array<i32>} : memref<16x128xf32, #tpu.memory_space<vmem>>, vector<16x128xf32>,
    return
  }
  func.func @transform_0(%arg0: i32, %arg1: i32) -> (i32, i32) {
    %c0_i32 = arith.constant 0 : i32
    %c0_i32_0 = arith.constant 0 : i32
    return %arg0, %c0_i32 : i32, i32
  }
  func.func @transform_1(%arg0: i32, %arg1: i32) -> (i32, i32) {
    %c0_i32 = arith.constant 0 : i32
    %c0_i32_0 = arith.constant 0 : i32
    return %c0_i32, %arg1 : i32, i32
  }
  func.func @transform_2(%arg0: i32, %arg1: i32) -> (i32, i32) {
    %c0_i32 = arith.constant 0 : i32
    %c0_i32_0 = arith.constant 0 : i32
    return %c0_i32, %arg1 : i32, i32
  }
  func.func @transform_3(%arg0: i32, %arg1: i32) -> (i32, i32) {
    %c0_i32 = arith.constant 0 : i32
    %c0_i32_0 = arith.constant 0 : i32
    return %arg1, %c0_i32 : i32, i32
  }
  func.func @transform_4(%arg0: i32, %arg1: i32) -> (i32, i32) {
    %c0_i32 = arith.constant 0 : i32
    %c0_i32_0 = arith.constant 0 : i32
    return %arg0, %c0_i32 : i32, i32
  }
}

</mosaic_0001>

<llo_original>
// kernel: tpu_custom_call.1
$region0: #{tpu_custom_call.1}
  #allocation0 [shape = 'u32[]', space=smem, size = 0x4, offset = 0x4, fixed_abs, tag = 'smem constant byte address 0x4 - core index']
  #allocation1 [shape = 'u32[144,128]{1,0:T(1,128)}', space=vmem, size = 0x12000, scoped, tag = 'internal scratch']
  #allocation2 [shape = 'f32[16,128]{1,0:T(8,128)}', space=vmem, size = 0x2000, scoped, tag = 'scratch operand']
  %s0 = inlined_call_operand.hbm [shape: f32[16,128], index: 0, kind: input, shape index: {}]
  %s1 = inlined_call_operand.hbm [shape: f32[128,256], index: 1, kind: input, shape index: {}]
  %s2 = inlined_call_operand.hbm [shape: f32[128,256], index: 2, kind: input, shape index: {}]
  %s3 = inlined_call_operand.hbm [shape: f32[256,128], index: 3, kind: input, shape index: {}]
  %s4 = inlined_call_operand.hbm [shape: f32[16,128], index: 4, kind: output, shape index: {}]
  %s5 = sld [smem:[#allocation0]]
  $region42: #{tpu_custom_call.1} parent=0
    _
  %s7 = ssub.s32 1, %s5
  %s8 = scalar_select 0, %s7, %s5
  $region1: #{tpu_custom_call.1} parent=0
    #allocation3 [shape = 'u8[8192]{0}', space=vmem, size = 0x2000, scoped, tag = 'input window, operand 0, single buffered']
    #allocation4 [shape = 's32[1]{0}', space=sflag, size = 0x4, scoped, tag = 'scoped memory for tpu_custom_call.1']
    #allocation5 [shape = 's32[1]{0}', space=sflag, size = 0x4, scoped, tag = 'scoped memory for tpu_custom_call.1']
    #allocation6 [shape = 'u8[131072]{0}', space=vmem, size = 0x20000, scoped, tag = 'input window, operand 1, single buffered']
    #allocation7 [shape = 's32[1]{0}', space=sflag, size = 0x4, scoped, tag = 'scoped memory for tpu_custom_call.1']
    #allocation8 [shape = 'u8[131072]{0}', space=vmem, size = 0x20000, scoped, tag = 'input window, operand 2, single buffered']
    #allocation9 [shape = 'u8[131072]{0}', space=vmem, size = 0x20000, scoped, tag = 'input window, operand 3, single buffered']
    #allocation10 [shape = 's32[1]{0}', space=sflag, size = 0x4, scoped, tag = 'scoped memory for tpu_custom_call.1']
    #allocation11 [shape = 'u8[8192]{0}', space=vmem, size = 0x2000, scoped, tag = 'output window, operand 0, single buffered']
    %9 = vsyncpa [#allocation4], 0
    %10 = vsyncpa [#allocation7], 0
    %11 = vsyncpa [#allocation10], 0
    %12 = vsyncpa [#allocation5], 0
    // Predicated region
    $region2: #{tpu_custom_call.1} parent=1 // pred_check
      _
    $region3: #{tpu_custom_call.1} parent=1 // pred_check_branch
      %14 = sbr.rel (0) target = $region5
    $region4: #{tpu_custom_call.1} parent=1 // pred_region
      %s16 = ssub.s32 256, 256
      %17 = vsyncadd [#allocation4], %s16
      %s18 = sshll.u32 [#allocation3], 4
      %s19 = int_to_ptr.vmem [resolvable:$true] %s18
      %24 = dma.hbm_to_vmem [thread:$0]  %s0, 256, %s19, [#allocation4], 128, 128, 8
    $region5: #{tpu_custom_call.1} parent=1 // pred_fallthru
      _
    // Predicated region
    $region6: #{tpu_custom_call.1} parent=1 // pred_check
      _
    $region7: #{tpu_custom_call.1} parent=1 // pred_check_branch
      %26 = sbr.rel (0) target = $region9
    $region8: #{tpu_custom_call.1} parent=1 // pred_region
      %s28 = ssub.s32 4096, 4096
      %29 = vsyncadd [#allocation7], %s28
      %s30 = sshll.u32 [#allocation6], 4
      %s31 = int_to_ptr.vmem [resolvable:$true] %s30
      %36 = dma.hbm_to_vmem [thread:$0]  %s1, 4096, %s31, [#allocation7], 256, 256, 16
    $region9: #{tpu_custom_call.1} parent=1 // pred_fallthru
      _
    // Predicated region
    $region10: #{tpu_custom_call.1} parent=1 // pred_check
      _
    $region11: #{tpu_custom_call.1} parent=1 // pred_check_branch
      %38 = sbr.rel (0) target = $region13
    $region12: #{tpu_custom_call.1} parent=1 // pred_region
      %s40 = ssub.s32 4096, 4096
      %41 = vsyncadd [#allocation7], %s40
      %s42 = sshll.u32 [#allocation8], 4
      %s43 = int_to_ptr.vmem [resolvable:$true] %s42
      %48 = dma.hbm_to_vmem [thread:$0]  %s2, 4096, %s43, [#allocation7], 256, 256, 16
    $region13: #{tpu_custom_call.1} parent=1 // pred_fallthru
      _
    // Predicated region
    $region14: #{tpu_custom_call.1} parent=1 // pred_check
      _
    $region15: #{tpu_custom_call.1} parent=1 // pred_check_branch
      %50 = sbr.rel (0) target = $region17
    $region16: #{tpu_custom_call.1} parent=1 // pred_region
      %s52 = ssub.s32 4096, 4096
      %53 = vsyncadd [#allocation10], %s52
      %s54 = sshll.u32 [#allocation9], 4
      %s55 = int_to_ptr.vmem [resolvable:$true] %s54
      %60 = dma.hbm_to_vmem [thread:$0]  %s3, 4096, %s55, [#allocation10], 128, 128, 8
    $region17: #{tpu_custom_call.1} parent=1 // pred_fallthru
      _
    // Predicated region
    $region18: #{tpu_custom_call.1} parent=1 // pred_check
      _
    $region19: #{tpu_custom_call.1} parent=1 // pred_check_branch
      %62 = sbr.rel (0) target = $region21
    $region20: #{tpu_custom_call.1} parent=1 // pred_region
      %63 = dma.done [#allocation4], 256
    $region21: #{tpu_custom_call.1} parent=1 // pred_fallthru
      _
    // Predicated region
    $region22: #{tpu_custom_call.1} parent=1 // pred_check
      _
    $region23: #{tpu_custom_call.1} parent=1 // pred_check_branch
      %65 = sbr.rel (0) target = $region25
    $region24: #{tpu_custom_call.1} parent=1 // pred_region
      %66 = dma.done [#allocation7], 4096
    $region25: #{tpu_custom_call.1} parent=1 // pred_fallthru
      _
    // Predicated region
    $region26: #{tpu_custom_call.1} parent=1 // pred_check
      _
    $region27: #{tpu_custom_call.1} parent=1 // pred_check_branch
      %68 = sbr.rel (0) target = $region29
    $region28: #{tpu_custom_call.1} parent=1 // pred_region
      %69 = dma.done [#allocation7], 4096
    $region29: #{tpu_custom_call.1} parent=1 // pred_fallthru
      _
    // Predicated region
    $region30: #{tpu_custom_call.1} parent=1 // pred_check
      _
    $region31: #{tpu_custom_call.1} parent=1 // pred_check_branch
      %71 = sbr.rel (0) target = $region33
    $region32: #{tpu_custom_call.1} parent=1 // pred_region
      %72 = dma.done [#allocation10], 4096
    $region33: #{tpu_custom_call.1} parent=1 // pred_fallthru
      _
    %v73 = vld [vmem:[#allocation3] sm:$0xff]
    %v74 = vld [vmem:[#allocation3 + $0x8] sm:$0xff]
    %v75 = vld [vmem:[#allocation6] sm:$0xff]
    %v76 = vld [vmem:[#allocation6 + $0x8] sm:$0xff]
    %v77 = vld [vmem:[#allocation6 + $0x10] sm:$0xff]
    %v78 = vld [vmem:[#allocation6 + $0x18] sm:$0xff]
    %v79 = vld [vmem:[#allocation6 + $0x20] sm:$0xff]
    %v80 = vld [vmem:[#allocation6 + $0x28] sm:$0xff]
    %v81 = vld [vmem:[#allocation6 + $0x30] sm:$0xff]
    %v82 = vld [vmem:[#allocation6 + $0x38] sm:$0xff]
    %v83 = vld [vmem:[#allocation6 + $0x40] sm:$0xff]
    %v84 = vld [vmem:[#allocation6 + $0x48] sm:$0xff]
    %v85 = vld [vmem:[#allocation6 + $0x50] sm:$0xff]
    %v86 = vld [vmem:[#allocation6 + $0x58] sm:$0xff]
    %v87 = vld [vmem:[#allocation6 + $0x60] sm:$0xff]
    %v88 = vld [vmem:[#allocation6 + $0x68] sm:$0xff]
    %v89 = vld [vmem:[#allocation6 + $0x70] sm:$0xff]
    %v90 = vld [vmem:[#allocation6 + $0x78] sm:$0xff]
    %v91 = vld [vmem:[#allocation6 + $0x80] sm:$0xff]
    %v92 = vld [vmem:[#allocation6 + $0x88] sm:$0xff]
    %v93 = vld [vmem:[#allocation6 + $0x90] sm:$0xff]
    %v94 = vld [vmem:[#allocation6 + $0x98] sm:$0xff]
    %v95 = vld [vmem:[#allocation6 + $0xa0] sm:$0xff]
    %v96 = vld [vmem:[#allocation6 + $0xa8] sm:$0xff]
    %v97 = vld [vmem:[#allocation6 + $0xb0] sm:$0xff]
    %v98 = vld [vmem:[#allocation6 + $0xb8] sm:$0xff]
    %v99 = vld [vmem:[#allocation6 + $0xc0] sm:$0xff]
    %v100 = vld [vmem:[#allocation6 + $0xc8] sm:$0xff]
    %v101 = vld [vmem:[#allocation6 + $0xd0] sm:$0xff]
    %v102 = vld [vmem:[#allocation6 + $0xd8] sm:$0xff]
    %v103 = vld [vmem:[#allocation6 + $0xe0] sm:$0xff]
    %v104 = vld [vmem:[#allocation6 + $0xe8] sm:$0xff]
    %v105 = vld [vmem:[#allocation6 + $0xf0] sm:$0xff]
    %v106 = vld [vmem:[#allocation6 + $0xf8] sm:$0xff]
    %107 = vmatprep.subr.mxu0 %v76
    %108 = vmatpush1.msra.mxu0 %v75
    %109 = vmatprep.subr.mxu0 %v78
    %110 = vmatpush1.msra.mxu0 %v77
    %111 = vmatprep.subr.mxu0 %v80
    %112 = vmatpush1.msra.mxu0 %v79
    %113 = vmatprep.subr.mxu0 %v82
    %114 = vmatpush1.msra.mxu0 %v81
    %115 = vmatprep.subr.mxu0 %v84
    %116 = vmatpush1.msra.mxu0 %v83
    %117 = vmatprep.subr.mxu0 %v86
    %118 = vmatpush1.msra.mxu0 %v85
    %119 = vmatprep.subr.mxu0 %v88
    %120 = vmatpush1.msra.mxu0 %v87
    %121 = vmatprep.subr.mxu0 %v90
    %122 = vmatpush1.msra.mxu0 %v89
    %123 = vmatprep.subr.mxu0 %v92
    %124 = vmatpush1.msra.mxu0 %v91
    %125 = vmatprep.subr.mxu0 %v94
    %126 = vmatpush1.msra.mxu0 %v93
    %127 = vmatprep.subr.mxu0 %v96
    %128 = vmatpush1.msra.mxu0 %v95
    %129 = vmatprep.subr.mxu0 %v98
    %130 = vmatpush1.msra.mxu0 %v97
    %131 = vmatprep.subr.mxu0 %v100
    %132 = vmatpush1.msra.mxu0 %v99
    %133 = vmatprep.subr.mxu0 %v102
    %134 = vmatpush1.msra.mxu0 %v101
    %135 = vmatprep.subr.mxu0 %v104
    %136 = vmatpush1.msra.mxu0 %v103
    %137 = vmatprep.subr.mxu0 %v106
    %138 = vmatpush1.msra.mxu0 %v105
    %139 = vmatprep.subr.mxu0 0.0
    %140 = vmatpush1.msra.mxu0 0.0
    %141 = vmatprep.subr.mxu0 0.0
    %142 = vmatpush1.msra.mxu0 0.0
    %143 = vmatprep.subr.mxu0 0.0
    %144 = vmatpush1.msra.mxu0 0.0
    %145 = vmatprep.subr.mxu0 0.0
    %146 = vmatpush1.msra.mxu0 0.0
    %147 = vmatprep.subr.mxu0 0.0
    %148 = vmatpush1.msra.mxu0 0.0
    %149 = vmatprep.subr.mxu0 0.0
    %150 = vmatpush1.msra.mxu0 0.0
    %151 = vmatprep.subr.mxu0 0.0
    %152 = vmatpush1.msra.mxu0 0.0
    %153 = vmatprep.subr.mxu0 0.0
    %154 = vmatpush1.msra.mxu0 0.0
    %155 = vmatprep.subr.mxu0 0.0
    %156 = vmatpush1.msra.mxu0 0.0
    %157 = vmatprep.subr.mxu0 0.0
    %158 = vmatpush1.msra.mxu0 0.0
    %159 = vmatprep.subr.mxu0 0.0
    %160 = vmatpush1.msra.mxu0 0.0
    %161 = vmatprep.subr.mxu0 0.0
    %162 = vmatpush1.msra.mxu0 0.0
    %163 = vmatprep.subr.mxu0 0.0
    %164 = vmatpush1.msra.mxu0 0.0
    %165 = vmatprep.subr.mxu0 0.0
    %166 = vmatpush1.msra.mxu0 0.0
    %167 = vmatprep.subr.mxu0 0.0
    %168 = vmatpush1.msra.mxu0 0.0
    %169 = vmatprep.subr.mxu0 0.0
    %170 = vmatpush1.msra.mxu0 0.0
    %171 = vmatprep.mubr.f32.mxu0 0.0
    %172 = vmatmul.mubr.f32.gmra.mrb[0].mxu0 %v73
    %v173 = vpop.f32.mrb[0].mxu0
    %v174 = vadd.f32 0.0, %v173
    %v175 = vpop.f32.mrb[0].mxu0
    %v176 = vadd.f32 0.0, %v175
    %177 = vmatprep.mubr.f32.mxu0 0.0
    %178 = vmatmul.mubr.f32.gmra.mrb[0].mxu0 %v74
    %v179 = vpop.f32.mrb[0].mxu0
    %v180 = vadd.f32 0.0, %v179
    %v181 = vpop.f32.mrb[0].mxu0
    %v182 = vadd.f32 0.0, %v181
    %183 = vdwg.mxu0
    %v184 = vld [vmem:[#allocation8] sm:$0xff]
    %v185 = vld [vmem:[#allocation8 + $0x8] sm:$0xff]
    %v186 = vld [vmem:[#allocation8 + $0x10] sm:$0xff]
    %v187 = vld [vmem:[#allocation8 + $0x18] sm:$0xff]
    %v188 = vld [vmem:[#allocation8 + $0x20] sm:$0xff]
    %v189 = vld [vmem:[#allocation8 + $0x28] sm:$0xff]
    %v190 = vld [vmem:[#allocation8 + $0x30] sm:$0xff]
    %v191 = vld [vmem:[#allocation8 + $0x38] sm:$0xff]
    %v192 = vld [vmem:[#allocation8 + $0x40] sm:$0xff]
    %v193 = vld [vmem:[#allocation8 + $0x48] sm:$0xff]
    %v194 = vld [vmem:[#allocation8 + $0x50] sm:$0xff]
    %v195 = vld [vmem:[#allocation8 + $0x58] sm:$0xff]
    %v196 = vld [vmem:[#allocation8 + $0x60] sm:$0xff]
    %v197 = vld [vmem:[#allocation8 + $0x68] sm:$0xff]
    %v198 = vld [vmem:[#allocation8 + $0x70] sm:$0xff]
    %v199 = vld [vmem:[#allocation8 + $0x78] sm:$0xff]
    %v200 = vld [vmem:[#allocation8 + $0x80] sm:$0xff]
    %v201 = vld [vmem:[#allocation8 + $0x88] sm:$0xff]
    %v202 = vld [vmem:[#allocation8 + $0x90] sm:$0xff]
    %v203 = vld [vmem:[#allocation8 + $0x98] sm:$0xff]
    %v204 = vld [vmem:[#allocation8 + $0xa0] sm:$0xff]
    %v205 = vld [vmem:[#allocation8 + $0xa8] sm:$0xff]
    %v206 = vld [vmem:[#allocation8 + $0xb0] sm:$0xff]
    %v207 = vld [vmem:[#allocation8 + $0xb8] sm:$0xff]
    %v208 = vld [vmem:[#allocation8 + $0xc0] sm:$0xff]
    %v209 = vld [vmem:[#allocation8 + $0xc8] sm:$0xff]
    %v210 = vld [vmem:[#allocation8 + $0xd0] sm:$0xff]
    %v211 = vld [vmem:[#allocation8 + $0xd8] sm:$0xff]
    %v212 = vld [vmem:[#allocation8 + $0xe0] sm:$0xff]
    %v213 = vld [vmem:[#allocation8 + $0xe8] sm:$0xff]
    %v214 = vld [vmem:[#allocation8 + $0xf0] sm:$0xff]
    %v215 = vld [vmem:[#allocation8 + $0xf8] sm:$0xff]
    %216 = vmatprep.subr.mxu0 %v185
    %217 = vmatpush1.msra.mxu0 %v184
    %218 = vmatprep.subr.mxu0 %v187
    %219 = vmatpush1.msra.mxu0 %v186
    %220 = vmatprep.subr.mxu0 %v189
    %221 = vmatpush1.msra.mxu0 %v188
    %222 = vmatprep.subr.mxu0 %v191
    %223 = vmatpush1.msra.mxu0 %v190
    %224 = vmatprep.subr.mxu0 %v193
    %225 = vmatpush1.msra.mxu0 %v192
    %226 = vmatprep.subr.mxu0 %v195
    %227 = vmatpush1.msra.mxu0 %v194
    %228 = vmatprep.subr.mxu0 %v197
    %229 = vmatpush1.msra.mxu0 %v196
    %230 = vmatprep.subr.mxu0 %v199
    %231 = vmatpush1.msra.mxu0 %v198
    %232 = vmatprep.subr.mxu0 %v201
    %233 = vmatpush1.msra.mxu0 %v200
    %234 = vmatprep.subr.mxu0 %v203
    %235 = vmatpush1.msra.mxu0 %v202
    %236 = vmatprep.subr.mxu0 %v205
    %237 = vmatpush1.msra.mxu0 %v204
    %238 = vmatprep.subr.mxu0 %v207
    %239 = vmatpush1.msra.mxu0 %v206
    %240 = vmatprep.subr.mxu0 %v209
    %241 = vmatpush1.msra.mxu0 %v208
    %242 = vmatprep.subr.mxu0 %v211
    %243 = vmatpush1.msra.mxu0 %v210
    %244 = vmatprep.subr.mxu0 %v213
    %245 = vmatpush1.msra.mxu0 %v212
    %246 = vmatprep.subr.mxu0 %v215
    %247 = vmatpush1.msra.mxu0 %v214
    %248 = vmatprep.subr.mxu0 0.0
    %249 = vmatpush1.msra.mxu0 0.0
    %250 = vmatprep.subr.mxu0 0.0
    %251 = vmatpush1.msra.mxu0 0.0
    %252 = vmatprep.subr.mxu0 0.0
    %253 = vmatpush1.msra.mxu0 0.0
    %254 = vmatprep.subr.mxu0 0.0
    %255 = vmatpush1.msra.mxu0 0.0
    %256 = vmatprep.subr.mxu0 0.0
    %257 = vmatpush1.msra.mxu0 0.0
    %258 = vmatprep.subr.mxu0 0.0
    %259 = vmatpush1.msra.mxu0 0.0
    %260 = vmatprep.subr.mxu0 0.0
    %261 = vmatpush1.msra.mxu0 0.0
    %262 = vmatprep.subr.mxu0 0.0
    %263 = vmatpush1.msra.mxu0 0.0
    %264 = vmatprep.subr.mxu0 0.0
    %265 = vmatpush1.msra.mxu0 0.0
    %266 = vmatprep.subr.mxu0 0.0
    %267 = vmatpush1.msra.mxu0 0.0
    %268 = vmatprep.subr.mxu0 0.0
    %269 = vmatpush1.msra.mxu0 0.0
    %270 = vmatprep.subr.mxu0 0.0
    %271 = vmatpush1.msra.mxu0 0.0
    %272 = vmatprep.subr.mxu0 0.0
    %273 = vmatpush1.msra.mxu0 0.0
    %274 = vmatprep.subr.mxu0 0.0
    %275 = vmatpush1.msra.mxu0 0.0
    %276 = vmatprep.subr.mxu0 0.0
    %277 = vmatpush1.msra.mxu0 0.0
    %278 = vmatprep.subr.mxu0 0.0
    %279 = vmatpush1.msra.mxu0 0.0
    %280 = vmatprep.mubr.f32.mxu0 0.0
    %281 = vmatmul.mubr.f32.gmra.mrb[0].mxu0 %v73
    %v282 = vpop.f32.mrb[0].mxu0
    %v283 = vadd.f32 0.0, %v282
    %v284 = vpop.f32.mrb[0].mxu0
    %v285 = vadd.f32 0.0, %v284
    %286 = vmatprep.mubr.f32.mxu0 0.0
    %287 = vmatmul.mubr.f32.gmra.mrb[0].mxu0 %v74
    %v288 = vpop.f32.mrb[0].mxu0
    %v289 = vadd.f32 0.0, %v288
    %v290 = vpop.f32.mrb[0].mxu0
    %v291 = vadd.f32 0.0, %v290
    %292 = vdwg.mxu0
    %v293 = vxor.u32 %v174, 2147483648
    %v294 = vxor.u32 %v176, 2147483648
    %v295 = vxor.u32 %v180, 2147483648
    %v296 = vxor.u32 %v182, 2147483648
    %v297 = vmul.f32 %v293, 1.442695
    %v298 = vpow.pop %v297
    %v299 = vmul.f32 %v294, 1.442695
    %v300 = vpow.pop %v299
    %v301 = vmul.f32 %v295, 1.442695
    %v302 = vpow.pop %v301
    %v303 = vmul.f32 %v296, 1.442695
    %v304 = vpow.pop %v303
    %v305 = vadd.f32 %v298, 1.0
    %v306 = vadd.f32 %v300, 1.0
    %v307 = vadd.f32 %v302, 1.0
    %v308 = vadd.f32 %v304, 1.0
    %v309 = vrcp.pop %v305
    %v310 = vmul.f32 1.0, %v309
    %v311 = vrcp.pop %v306
    %v312 = vmul.f32 1.0, %v311
    %v313 = vrcp.pop %v307
    %v314 = vmul.f32 1.0, %v313
    %v315 = vrcp.pop %v308
    %v316 = vmul.f32 1.0, %v315
    %v317 = vmul.f32 %v174, %v310
    %v318 = vmul.f32 %v176, %v312
    %v319 = vmul.f32 %v180, %v314
    %v320 = vmul.f32 %v182, %v316
    %v321 = vmul.f32 %v317, %v283
    %v322 = vmul.f32 %v318, %v285
    %v323 = vmul.f32 %v319, %v289
    %v324 = vmul.f32 %v320, %v291
    %v325 = vld [vmem:[#allocation9] sm:$0xff]
    %v326 = vld [vmem:[#allocation9 + $0x8] sm:$0xff]
    %v327 = vld [vmem:[#allocation9 + $0x10] sm:$0xff]
    %v328 = vld [vmem:[#allocation9 + $0x18] sm:$0xff]
    %v329 = vld [vmem:[#allocation9 + $0x20] sm:$0xff]
    %v330 = vld [vmem:[#allocation9 + $0x28] sm:$0xff]
    %v331 = vld [vmem:[#allocation9 + $0x30] sm:$0xff]
    %v332 = vld [vmem:[#allocation9 + $0x38] sm:$0xff]
    %v333 = vld [vmem:[#allocation9 + $0x40] sm:$0xff]
    %v334 = vld [vmem:[#allocation9 + $0x48] sm:$0xff]
    %v335 = vld [vmem:[#allocation9 + $0x50] sm:$0xff]
    %v336 = vld [vmem:[#allocation9 + $0x58] sm:$0xff]
    %v337 = vld [vmem:[#allocation9 + $0x60] sm:$0xff]
    %v338 = vld [vmem:[#allocation9 + $0x68] sm:$0xff]
    %v339 = vld [vmem:[#allocation9 + $0x70] sm:$0xff]
    %v340 = vld [vmem:[#allocation9 + $0x78] sm:$0xff]
    %v341 = vld [vmem:[#allocation9 + $0x80] sm:$0xff]
    %v342 = vld [vmem:[#allocation9 + $0x88] sm:$0xff]
    %v343 = vld [vmem:[#allocation9 + $0x90] sm:$0xff]
    %v344 = vld [vmem:[#allocation9 + $0x98] sm:$0xff]
    %v345 = vld [vmem:[#allocation9 + $0xa0] sm:$0xff]
    %v346 = vld [vmem:[#allocation9 + $0xa8] sm:$0xff]
    %v347 = vld [vmem:[#allocation9 + $0xb0] sm:$0xff]
    %v348 = vld [vmem:[#allocation9 + $0xb8] sm:$0xff]
    %v349 = vld [vmem:[#allocation9 + $0xc0] sm:$0xff]
    %v350 = vld [vmem:[#allocation9 + $0xc8] sm:$0xff]
    %v351 = vld [vmem:[#allocation9 + $0xd0] sm:$0xff]
    %v352 = vld [vmem:[#allocation9 + $0xd8] sm:$0xff]
    %v353 = vld [vmem:[#allocation9 + $0xe0] sm:$0xff]
    %v354 = vld [vmem:[#allocation9 + $0xe8] sm:$0xff]
    %v355 = vld [vmem:[#allocation9 + $0xf0] sm:$0xff]
    %v356 = vld [vmem:[#allocation9 + $0xf8] sm:$0xff]
    %357 = vmatprep.subr.mxu0 0.0
    %358 = vmatpush1.msra.mxu0 %v325
    %359 = vmatprep.subr.mxu0 0.0
    %360 = vmatpush1.msra.mxu0 %v326
    %361 = vmatprep.subr.mxu0 0.0
    %362 = vmatpush1.msra.mxu0 %v327
    %363 = vmatprep.subr.mxu0 0.0
    %364 = vmatpush1.msra.mxu0 %v328
    %365 = vmatprep.subr.mxu0 0.0
    %366 = vmatpush1.msra.mxu0 %v329
    %367 = vmatprep.subr.mxu0 0.0
    %368 = vmatpush1.msra.mxu0 %v330
    %369 = vmatprep.subr.mxu0 0.0
    %370 = vmatpush1.msra.mxu0 %v331
    %371 = vmatprep.subr.mxu0 0.0
    %372 = vmatpush1.msra.mxu0 %v332
    %373 = vmatprep.subr.mxu0 0.0
    %374 = vmatpush1.msra.mxu0 %v333
    %375 = vmatprep.subr.mxu0 0.0
    %376 = vmatpush1.msra.mxu0 %v334
    %377 = vmatprep.subr.mxu0 0.0
    %378 = vmatpush1.msra.mxu0 %v335
    %379 = vmatprep.subr.mxu0 0.0
    %380 = vmatpush1.msra.mxu0 %v336
    %381 = vmatprep.subr.mxu0 0.0
    %382 = vmatpush1.msra.mxu0 %v337
    %383 = vmatprep.subr.mxu0 0.0
    %384 = vmatpush1.msra.mxu0 %v338
    %385 = vmatprep.subr.mxu0 0.0
    %386 = vmatpush1.msra.mxu0 %v339
    %387 = vmatprep.subr.mxu0 0.0
    %388 = vmatpush1.msra.mxu0 %v340
    %389 = vmatprep.subr.mxu0 0.0
    %390 = vmatpush1.msra.mxu0 %v341
    %391 = vmatprep.subr.mxu0 0.0
    %392 = vmatpush1.msra.mxu0 %v342
    %393 = vmatprep.subr.mxu0 0.0
    %394 = vmatpush1.msra.mxu0 %v343
    %395 = vmatprep.subr.mxu0 0.0
    %396 = vmatpush1.msra.mxu0 %v344
    %397 = vmatprep.subr.mxu0 0.0
    %398 = vmatpush1.msra.mxu0 %v345
    %399 = vmatprep.subr.mxu0 0.0
    %400 = vmatpush1.msra.mxu0 %v346
    %401 = vmatprep.subr.mxu0 0.0
    %402 = vmatpush1.msra.mxu0 %v347
    %403 = vmatprep.subr.mxu0 0.0
    %404 = vmatpush1.msra.mxu0 %v348
    %405 = vmatprep.subr.mxu0 0.0
    %406 = vmatpush1.msra.mxu0 %v349
    %407 = vmatprep.subr.mxu0 0.0
    %408 = vmatpush1.msra.mxu0 %v350
    %409 = vmatprep.subr.mxu0 0.0
    %410 = vmatpush1.msra.mxu0 %v351
    %411 = vmatprep.subr.mxu0 0.0
    %412 = vmatpush1.msra.mxu0 %v352
    %413 = vmatprep.subr.mxu0 0.0
    %414 = vmatpush1.msra.mxu0 %v353
    %415 = vmatprep.subr.mxu0 0.0
    %416 = vmatpush1.msra.mxu0 %v354
    %417 = vmatprep.subr.mxu0 0.0
    %418 = vmatpush1.msra.mxu0 %v355
    %419 = vmatprep.subr.mxu0 0.0
    %420 = vmatpush1.msra.mxu0 %v356
    %421 = vmatprep.mubr.f32.mxu0 %v322
    %422 = vmatmul.mubr.f32.gmra.mrb[0].mxu0 %v321
    %v423 = vpop.f32.mrb[0].mxu0
    %v424 = vadd.f32 0.0, %v423
    %v425 = vpop.f32.mrb[0].mxu0
    %426 = vmatprep.mubr.f32.mxu0 %v324
    %427 = vmatmul.mubr.f32.gmra.mrb[0].mxu0 %v323
    %v428 = vpop.f32.mrb[0].mxu0
    %v429 = vadd.f32 0.0, %v428
    %v430 = vpop.f32.mrb[0].mxu0
    %431 = vdwg.mxu0
    %432 = vst [vmem:[#allocation11] sm:$0xff] %v424
    %433 = vst [vmem:[#allocation11 + $0x8] sm:$0xff] %v429
    // Predicated region
    $region34: #{tpu_custom_call.1} parent=1 // pred_check
      _
    $region35: #{tpu_custom_call.1} parent=1 // pred_check_branch
      %435 = sbr.rel (0) target = $region37
    $region36: #{tpu_custom_call.1} parent=1 // pred_region
      %s437 = ssub.s32 256, 256
      %438 = vsyncadd [#allocation5], %s437
      %s439 = sshll.u32 [#allocation11], 4
      %s440 = int_to_ptr.vmem [resolvable:$true] %s439
      %445 = dma.vmem_to_hbm [thread:$0]  %s440, 256, %s4, [#allocation5], 128, 128, 8
    $region37: #{tpu_custom_call.1} parent=1 // pred_fallthru
      _
    // Predicated region
    $region38: #{tpu_custom_call.1} parent=1 // pred_check
      _
    $region39: #{tpu_custom_call.1} parent=1 // pred_check_branch
      %447 = sbr.rel (0) target = $region41
    $region40: #{tpu_custom_call.1} parent=1 // pred_region
      %448 = dma.done [#allocation5], 256
    $region41: #{tpu_custom_call.1} parent=1 // pred_fallthru
      _
    %449 = vsyncpa [#allocation4], 1
    %450 = vsyncpa [#allocation7], 1
    %451 = vsyncpa [#allocation10], 1
    %452 = vsyncpa [#allocation5], 1

</llo_original>
